<compile_context>
chip_gen: v6e
topology: v6e:2x2x1
jax: 0.10.0
libtpu: 0.0.40
codegen_flags: <defaults>
</compile_context>

<pallas_src>
import jax
import jax.numpy as jnp
from jax.experimental import pallas as pl
from jax.experimental.pallas import tpu as pltpu


def _round_up(a, b):
    return -(-a // b) * b


def _chip_profile():
    """Returns (physical VMEM bytes per core, TensorCores sharing the grid)."""
    vmem = 64 << 20                      # conservative default (v7x-sized)
    try:
        info = pltpu.get_tpu_info()
        v = int(getattr(info, "vmem_capacity_bytes", 0) or 0)
        if v > 0:
            vmem = v
    except Exception:
        pass
    cores = 1
    try:
        kind = jax.devices()[0].device_kind.lower()
        # Multi-TC (megacore) parts: v4, v5p, v7x.  v5e/v6e (and v2/v3 as
        # exposed by JAX) run a Pallas grid on a single TensorCore.
        if ("v4" in kind or "v7" in kind
                or ("v5" in kind and "lite" not in kind and "5e" not in kind)):
            cores = 2
    except Exception:
        pass
    return vmem, cores


def _choose_tiling(n_rows, nc, c, hw, itemsize):
    """Pick (tn, grid, vmem_limit_bytes) for the row axis of (N, nc, C, HW)."""
    phys_vmem, n_cores = _chip_profile()

    # VMEM bytes of one input-block row, accounting for (sublane, 128) tile
    # padding of the trailing (C, HW) dims.  With HW < 128 the lane axis pads
    # up to 128 (2x for HW=64); that padding is inherent to the free
    # (N, nc, C, H*W) view (fixing it needs an upstream spatial size whose
    # H*W is a multiple of 128), so we budget on padded bytes.
    sublane = 8 * max(1, 4 // itemsize)
    row_bytes = nc * _round_up(c, sublane) * _round_up(hw, 128) * itemsize

    if n_cores >= 2:
        # v7x-class: only 64 MiB VMEM per TC -> modest double-buffered blocks.
        block_budget = 8 << 20
    else:
        # v5e / v6e: single TC, 128 MiB VMEM -> big streaming blocks and as
        # few grid steps as possible (per-step overhead ~0.35 us; streaming
        # roofline fraction grows sharply with tile size).  No parallelism
        # reason to split the grid.
        block_budget = min(24 << 20, phys_vmem // 5)

    tn = (block_budget // max(row_bytes, 1)) // 8 * 8
    tn = max(8, min(tn, _round_up(n_rows, 8)))

    grid = pl.cdiv(n_rows, tn)
    if n_cores >= 2 and n_rows > 8:
        # Both TensorCores should see equal-sized DMA streams: even step
        # count, ideally >= 4.
        min_steps = 4 if n_rows >= 32 else 2
        grid = max(grid, min_steps)
        if grid % 2:
            grid += 1
        grid = min(grid, pl.cdiv(n_rows, 8))
    # Rebalance tn so last-block padding is minimal.
    tn = _round_up(pl.cdiv(n_rows, grid), 8)
    grid = pl.cdiv(n_rows, tn)

    # Double-buffered input block + resident weights / bias / output + slack.
    vmem_limit = 2 * tn * row_bytes + (8 << 20)
    vmem_limit = max(32 << 20, min(vmem_limit, phys_vmem * 3 // 4))
    return tn, grid, int(vmem_limit)


def vanilla_embed_kernel(x_ref, w1_ref, b1_ref, w2_ref, b2_ref, we_ref, be_ref,
                         o_ref):
    # x_ref: (tn, nc, C, HW).  AdaptiveMaxPool3d(1) == per-channel global max
    # over (num_contexts, H*W).  Read one context slice at a time (zero-cost
    # ref view), reduce it over the lane axis (XLU), and keep only a tiny
    # (tn, C) running max (VPU) -- no (tn, C, HW) intermediate hits VMEM.
    nc = x_ref.shape[1]
    pooled = jnp.max(x_ref[:, 0, :, :], axis=-1)             # (tn, C)
    for i in range(1, nc):                                    # static, tiny trip count
        pooled = jnp.maximum(pooled, jnp.max(x_ref[:, i, :, :], axis=-1))

    cdt = w1_ref.dtype                                        # MXU operand dtype
    # fc_layers: Dropout (identity in eval) -> Linear -> ReLU, twice.
    h = jnp.dot(pooled.astype(cdt), w1_ref[...],
                preferred_element_type=jnp.float32)
    h = jnp.maximum(h + b1_ref[...], 0.0)
    h = jnp.dot(h.astype(cdt), w2_ref[...],
                preferred_element_type=jnp.float32)
    h = jnp.maximum(h + b2_ref[...], 0.0)
    # embedding_layer: Linear (no activation).  we/be are lane-padded to a
    # multiple of 128 in the wrapper so this store is a dense (unmasked) vst.
    e = jnp.dot(h.astype(cdt), we_ref[...],
                preferred_element_type=jnp.float32) + be_ref[...]
    o_ref[...] = e.astype(o_ref.dtype)


def vanilla_embed(x, num_frames, params, *, num_contexts, tn=None):
    """x: (B, T, C, H, W) -> (B, num_frames, embedding_size).

    Matches VanillaEmbed.forward:
      view(B*num_frames, nc, C, H, W) -> transpose(1, 2) -> AdaptiveMaxPool3d(1)
      -> flatten -> fc_layers (Dropout/Linear/ReLU x2) -> embedding Linear.
    """
    B, T, C, H, W = x.shape
    nc = T // num_frames
    assert nc == num_contexts, "num_context mismatch with cfg.DATA.NUM_CONTEXTS"
    N = B * num_frames
    HW = H * W

    xr = x.reshape(N, nc, C, HW)                  # free view, no HBM copy

    w1, b1, w2, b2, we, be = params
    H1, H2, E = w1.shape[1], w2.shape[1], we.shape[1]

    # Lane-dense output: pad embedding dim to a multiple of 128 (tiny weights,
    # negligible cost) and slice [:, :E] afterwards.
    E_pad = _round_up(E, 128)
    if E_pad != E:
        we = jnp.pad(we, ((0, 0), (0, E_pad - E)))
        be = jnp.pad(be, ((0, 0), (0, E_pad - E)))

    # bf16 fast path: kernel is HBM-read-bound, so bf16 activations halve the
    # streamed bytes.  Weights follow the activation dtype (bf16 MXU operands,
    # f32 accumulation); biases stay f32 and are added to the f32 accumulator.
    if x.dtype == jnp.bfloat16:
        w1, w2, we = (w.astype(jnp.bfloat16) for w in (w1, w2, we))
    b1, b2, be = (b.astype(jnp.float32) for b in (b1, b2, be))

    itemsize = jnp.dtype(x.dtype).itemsize
    if tn is None:
        tn, grid, vmem_limit = _choose_tiling(N, nc, C, HW, itemsize)
    else:
        grid = pl.cdiv(N, tn)
        vmem_limit = 64 << 20
    N_pad = tn * grid
    if N_pad != N:
        # Padded rows only influence padded output rows, which are sliced off.
        xr = jnp.pad(xr, ((0, N_pad - N), (0, 0), (0, 0), (0, 0)))

    flops = 2 * N_pad * (C * H1 + H1 * H2 + H2 * E_pad)
    bytes_accessed = (
        N_pad * nc * C * HW * itemsize
        + sum(int(p.size) * jnp.dtype(p.dtype).itemsize
              for p in (w1, b1, w2, b2, we, be))
        + N_pad * E_pad * itemsize)

    out = pl.pallas_call(
        vanilla_embed_kernel,
        out_shape=jax.ShapeDtypeStruct((N_pad, E_pad), x.dtype),
        grid_spec=pltpu.PrefetchScalarGridSpec(
            num_scalar_prefetch=0,
            grid=(grid,),
            in_specs=[
                pl.BlockSpec((tn, nc, C, HW), lambda i: (i, 0, 0, 0)),
                pl.BlockSpec((C, H1), lambda i: (0, 0)),
                pl.BlockSpec((1, H1), lambda i: (0, 0)),
                pl.BlockSpec((H1, H2), lambda i: (0, 0)),
                pl.BlockSpec((1, H2), lambda i: (0, 0)),
                pl.BlockSpec((H2, E_pad), lambda i: (0, 0)),
                pl.BlockSpec((1, E_pad), lambda i: (0, 0)),
            ],
            out_specs=pl.BlockSpec((tn, E_pad), lambda i: (i, 0)),
        ),
        compiler_params=pltpu.CompilerParams(
            dimension_semantics=("parallel",),
            vmem_limit_bytes=vmem_limit,
        ),
        cost_estimate=pl.CostEstimate(
            flops=int(flops),
            transcendentals=0,
            bytes_accessed=int(bytes_accessed)),
    )(xr, w1, b1, w2, b2, we, be)

    out = out[:N, :E]
    return out.reshape(B, num_frames, E)


def _reference(x, num_frames, params):
    B, T, C, H, W = x.shape
    nc = T // num_frames
    N = B * num_frames
    pooled = jnp.max(x.astype(jnp.float32).reshape(N, nc, C, H * W), axis=(1, 3))
    w1, b1, w2, b2, we, be = params
    h = jnp.maximum(pooled @ w1 + b1, 0.0)
    h = jnp.maximum(h @ w2 + b2, 0.0)
    e = h @ we + be
    return e.reshape(B, num_frames, we.shape[1])


if __name__ == "__main__":
    # Synthetic cfg:
    #   MODEL.BASE_MODEL.OUT_CHANNEL         = 32   (C)
    #   MODEL.EMBEDDER_MODEL.FC_LAYERS       = [(64, True), (64, True)]
    #   MODEL.EMBEDDER_MODEL.CAPACITY_SCALAR = 1
    #   MODEL.EMBEDDER_MODEL.EMBEDDING_SIZE  = 32
    #   DATA.NUM_CONTEXTS                    = 2
    B, num_frames, num_contexts = 2, 8, 2
    C, H, W = 32, 8, 8
    T = num_frames * num_contexts
    H1 = H2 = 64
    E = 32

    key = jax.random.PRNGKey(0)
    kx, k1, k2, k3, k4, k5, k6 = jax.random.split(key, 7)
    x = jax.random.normal(kx, (B, T, C, H, W), dtype=jnp.float32)

    # Deterministic synthetic parameters (Linear stored as (in, out), bias (1, out)).
    w1 = jax.random.normal(k1, (C, H1), dtype=jnp.float32) * (1.0 / jnp.sqrt(C))
    b1 = jax.random.normal(k2, (1, H1), dtype=jnp.float32) * 0.01
    w2 = jax.random.normal(k3, (H1, H2), dtype=jnp.float32) * (1.0 / jnp.sqrt(H1))
    b2 = jax.random.normal(k4, (1, H2), dtype=jnp.float32) * 0.01
    we = jax.random.normal(k5, (H2, E), dtype=jnp.float32) * (1.0 / jnp.sqrt(H2))
    be = jax.random.normal(k6, (1, E), dtype=jnp.float32) * 0.01
    params = (w1, b1, w2, b2, we, be)

    # fp32 path (matches the PyTorch module numerics).
    out = vanilla_embed(x, num_frames, params, num_contexts=num_contexts)
    out = jax.block_until_ready(out)
    ref = _reference(x, num_frames, params)
    assert out.shape == (B, num_frames, E), out.shape
    assert jnp.allclose(out, ref, atol=1e-5, rtol=1e-5), "fp32 mismatch vs reference"

    # bf16 activation fast path (halves streamed HBM bytes; f32 accumulation).
    xb = x.astype(jnp.bfloat16)
    out_b = vanilla_embed(xb, num_frames, params, num_contexts=num_contexts)
    out_b = jax.block_until_ready(out_b)
    params_b = tuple(p.astype(jnp.bfloat16).astype(jnp.float32) for p in params)
    ref_b = _reference(xb, num_frames, params_b)
    assert out_b.shape == (B, num_frames, E), out_b.shape
    assert jnp.allclose(out_b.astype(jnp.float32), ref_b, atol=1e-1, rtol=1e-1), \
        "bf16 mismatch vs reference"

    print("KERNEL_OK")
</pallas_src>

<mosaic_0001>
module attributes {stable_mosaic.version = 11 : i64} {
  func.func @vanilla_embed_kernel(%arg0: i32, %arg1: memref<16x2x32x64xf32, #tpu.memory_space<vmem>>, %arg2: memref<32x64xf32, #tpu.memory_space<vmem>>, %arg3: memref<1x64xf32, #tpu.memory_space<vmem>>, %arg4: memref<64x64xf32, #tpu.memory_space<vmem>>, %arg5: memref<1x64xf32, #tpu.memory_space<vmem>>, %arg6: memref<64x128xf32, #tpu.memory_space<vmem>>, %arg7: memref<1x128xf32, #tpu.memory_space<vmem>>, %arg8: memref<16x128xf32, #tpu.memory_space<vmem>>) attributes {dimension_semantics = [#tpu.dimension_semantics<parallel>], iteration_bounds = array<i64: 1>, scalar_prefetch = 0 : i64, scratch_operands = 0 : i64, tpu.core_type = #tpu.core_type<tc>, window_params = [{transform_indices = @transform_0, window_bounds = array<i64: 16, 2, 32, 64>}, {pipeline_mode = #tpu.pipeline_mode<synchronous>, transform_indices = @transform_1, window_bounds = array<i64: 32, 64>}, {pipeline_mode = #tpu.pipeline_mode<synchronous>, transform_indices = @transform_2, window_bounds = array<i64: 1, 64>}, {pipeline_mode = #tpu.pipeline_mode<synchronous>, transform_indices = @transform_3, window_bounds = array<i64: 64, 64>}, {pipeline_mode = #tpu.pipeline_mode<synchronous>, transform_indices = @transform_4, window_bounds = array<i64: 1, 64>}, {pipeline_mode = #tpu.pipeline_mode<synchronous>, transform_indices = @transform_5, window_bounds = array<i64: 64, 128>}, {pipeline_mode = #tpu.pipeline_mode<synchronous>, transform_indices = @transform_6, window_bounds = array<i64: 1, 128>}, {transform_indices = @transform_7, window_bounds = array<i64: 16, 128>}]} {
    %c0 = arith.constant 0 : index
    %c0_0 = arith.constant 0 : index
    %c0_1 = arith.constant 0 : index
    %c0_2 = arith.constant 0 : index
    %0 = vector.load %arg1[%c0, %c0_0, %c0_1, %c0_2] : memref<16x2x32x64xf32, #tpu.memory_space<vmem>>, vector<16x1x32x64xf32>
    %1 = vector.shape_cast %0 : vector<16x1x32x64xf32> to vector<16x32x64xf32>
    %cst = arith.constant dense<0xFF800000> : vector<16x32xf32>
    %2 = vector.multi_reduction <maximumf>, %1, %cst [2] : vector<16x32x64xf32> to vector<16x32xf32>
    %c0_3 = arith.constant 0 : index
    %c1 = arith.constant 1 : index
    %c0_4 = arith.constant 0 : index
    %c0_5 = arith.constant 0 : index
    %3 = vector.load %arg1[%c0_3, %c1, %c0_4, %c0_5] : memref<16x2x32x64xf32, #tpu.memory_space<vmem>>, vector<16x1x32x64xf32>
    %4 = vector.shape_cast %3 : vector<16x1x32x64xf32> to vector<16x32x64xf32>
    %cst_6 = arith.constant dense<0xFF800000> : vector<16x32xf32>
    %5 = vector.multi_reduction <maximumf>, %4, %cst_6 [2] : vector<16x32x64xf32> to vector<16x32xf32>
    %6 = arith.maximumf %2, %5 : vector<16x32xf32>
    %c0_7 = arith.constant 0 : index
    %c0_8 = arith.constant 0 : index
    %7 = vector.load %arg2[%c0_7, %c0_8] : memref<32x64xf32, #tpu.memory_space<vmem>>, vector<32x64xf32>
    %cst_9 = arith.constant dense<0.000000e+00> : vector<16x64xf32>
    %8 = tpu.matmul %6, %7, %cst_9 {dimension_numbers = #tpu.dot_dimension_numbers<[1], [0], [0], [1], [0, 0, 1, 1], [], []>} : vector<16x32xf32>, vector<32x64xf32>, vector<16x64xf32> -> vector<16x64xf32>
    %c0_10 = arith.constant 0 : index
    %c0_11 = arith.constant 0 : index
    %9 = vector.load %arg3[%c0_10, %c0_11] : memref<1x64xf32, #tpu.memory_space<vmem>>, vector<1x64xf32>
    %10 = vector.broadcast %9 : vector<1x64xf32> to vector<16x64xf32>
    %11 = arith.addf %8, %10 : vector<16x64xf32>
    %cst_12 = arith.constant 0.000000e+00 : f32
    %12 = vector.broadcast %cst_12 : f32 to vector<16x64xf32>
    %13 = arith.maximumf %11, %12 : vector<16x64xf32>
    %c0_13 = arith.constant 0 : index
    %c0_14 = arith.constant 0 : index
    %14 = vector.load %arg4[%c0_13, %c0_14] : memref<64x64xf32, #tpu.memory_space<vmem>>, vector<64x64xf32>
    %cst_15 = arith.constant dense<0.000000e+00> : vector<16x64xf32>
    %15 = tpu.matmul %13, %14, %cst_15 {dimension_numbers = #tpu.dot_dimension_numbers<[1], [0], [0], [1], [0, 0, 1, 1], [], []>} : vector<16x64xf32>, vector<64x64xf32>, vector<16x64xf32> -> vector<16x64xf32>
    %c0_16 = arith.constant 0 : index
    %c0_17 = arith.constant 0 : index
    %16 = vector.load %arg5[%c0_16, %c0_17] : memref<1x64xf32, #tpu.memory_space<vmem>>, vector<1x64xf32>
    %17 = vector.broadcast %16 : vector<1x64xf32> to vector<16x64xf32>
    %18 = arith.addf %15, %17 : vector<16x64xf32>
    %cst_18 = arith.constant 0.000000e+00 : f32
    %19 = vector.broadcast %cst_18 : f32 to vector<16x64xf32>
    %20 = arith.maximumf %18, %19 : vector<16x64xf32>
    %c0_19 = arith.constant 0 : index
    %c0_20 = arith.constant 0 : index
    %21 = vector.load %arg6[%c0_19, %c0_20] : memref<64x128xf32, #tpu.memory_space<vmem>>, vector<64x128xf32>
    %cst_21 = arith.constant dense<0.000000e+00> : vector<16x128xf32>
    %22 = tpu.matmul %20, %21, %cst_21 {dimension_numbers = #tpu.dot_dimension_numbers<[1], [0], [0], [1], [0, 0, 1, 1], [], []>} : vector<16x64xf32>, vector<64x128xf32>, vector<16x128xf32> -> vector<16x128xf32>
    %c0_22 = arith.constant 0 : index
    %c0_23 = arith.constant 0 : index
    %23 = vector.load %arg7[%c0_22, %c0_23] : memref<1x128xf32, #tpu.memory_space<vmem>>, vector<1x128xf32>
    %24 = vector.broadcast %23 : vector<1x128xf32> to vector<16x128xf32>
    %25 = arith.addf %22, %24 : vector<16x128xf32>
    %c0_24 = arith.constant 0 : index
    %c0_25 = arith.constant 0 : index
    %26 = vector.load %arg8[%c0_24, %c0_25] : memref<16x128xf32, #tpu.memory_space<vmem>>, vector<16x128xf32>
    tpu.vector_store %arg8[%c0_24, %c0_25], %25 {strides = array<i32>} : memref<16x128xf32, #tpu.memory_space<vmem>>, vector<16x128xf32>,
    return
  }
  func.func @transform_0(%arg0: i32) -> (i32, i32, i32, i32) {
    %c0_i32 = arith.constant 0 : i32
    %c0_i32_0 = arith.constant 0 : i32
    %c0_i32_1 = arith.constant 0 : i32
    %c0_i32_2 = arith.constant 0 : i32
    return %arg0, %c0_i32, %c0_i32_0, %c0_i32_1 : i32, i32, i32, i32
  }
  func.func @transform_1(%arg0: i32) -> (i32, i32) {
    %c0_i32 = arith.constant 0 : i32
    %c0_i32_0 = arith.constant 0 : i32
    %c0_i32_1 = arith.constant 0 : i32
    return %c0_i32, %c0_i32_0 : i32, i32
  }
  func.func @transform_2(%arg0: i32) -> (i32, i32) {
    %c0_i32 = arith.constant 0 : i32
    %c0_i32_0 = arith.constant 0 : i32
    %c0_i32_1 = arith.constant 0 : i32
    return %c0_i32, %c0_i32_0 : i32, i32
  }
  func.func @transform_3(%arg0: i32) -> (i32, i32) {
    %c0_i32 = arith.constant 0 : i32
    %c0_i32_0 = arith.constant 0 : i32
    %c0_i32_1 = arith.constant 0 : i32
    return %c0_i32, %c0_i32_0 : i32, i32
  }
  func.func @transform_4(%arg0: i32) -> (i32, i32) {
    %c0_i32 = arith.constant 0 : i32
    %c0_i32_0 = arith.constant 0 : i32
    %c0_i32_1 = arith.constant 0 : i32
    return %c0_i32, %c0_i32_0 : i32, i32
  }
  func.func @transform_5(%arg0: i32) -> (i32, i32) {
    %c0_i32 = arith.constant 0 : i32
    %c0_i32_0 = arith.constant 0 : i32
    %c0_i32_1 = arith.constant 0 : i32
    return %c0_i32, %c0_i32_0 : i32, i32
  }
  func.func @transform_6(%arg0: i32) -> (i32, i32) {
    %c0_i32 = arith.constant 0 : i32
    %c0_i32_0 = arith.constant 0 : i32
    %c0_i32_1 = arith.constant 0 : i32
    return %c0_i32, %c0_i32_0 : i32, i32
  }
  func.func @transform_7(%arg0: i32) -> (i32, i32) {
    %c0_i32 = arith.constant 0 : i32
    %c0_i32_0 = arith.constant 0 : i32
    return %arg0, %c0_i32 : i32, i32
  }
}

</mosaic_0001>

<llo_original>
// kernel: tpu_custom_call.1
$region0: #{tpu_custom_call.1}
  #allocation0 [shape = 'u32[]', space=smem, size = 0x4, offset = 0x4, fixed_abs, tag = 'smem constant byte address 0x4 - core index']
  #allocation1 [shape = 'u32[144,128]{1,0:T(1,128)}', space=vmem, size = 0x12000, scoped, tag = 'internal scratch']
  %s0 = inlined_call_operand.hbm [shape: f32[16,2,32,64], index: 0, kind: input, shape index: {}]
  %s1 = inlined_call_operand.hbm [shape: f32[32,64], index: 1, kind: input, shape index: {}]
  %s2 = inlined_call_operand.vmem [shape: f32[1,64], index: 2, kind: input, shape index: {}]
  %s3 = inlined_call_operand.hbm [shape: f32[64,64], index: 3, kind: input, shape index: {}]
  %s4 = inlined_call_operand.vmem [shape: f32[1,64], index: 4, kind: input, shape index: {}]
  %s5 = inlined_call_operand.hbm [shape: f32[64,128], index: 5, kind: input, shape index: {}]
  %s6 = inlined_call_operand.vmem [shape: f32[1,128], index: 6, kind: input, shape index: {}]
  %s7 = inlined_call_operand.hbm [shape: f32[16,128], index: 7, kind: output, shape index: {}]
  %s8 = sld [smem:[#allocation0]]
  $region54: #{tpu_custom_call.1} parent=0
    _
  %s10 = ssub.s32 1, %s8
  %s11 = scalar_select 0, %s10, %s8
  $region1: #{tpu_custom_call.1} parent=0
    #allocation2 [shape = 'u8[524288]{0}', space=vmem, size = 0x80000, scoped, tag = 'input window, operand 0, single buffered']
    #allocation3 [shape = 's32[1]{0}', space=sflag, size = 0x4, scoped, tag = 'scoped memory for tpu_custom_call.1']
    #allocation4 [shape = 's32[1]{0}', space=sflag, size = 0x4, scoped, tag = 'scoped memory for tpu_custom_call.1']
    #allocation5 [shape = 'u8[16384]{0}', space=vmem, size = 0x4000, scoped, tag = 'input window, operand 1, single buffered']
    #allocation6 [shape = 's32[1]{0}', space=sflag, size = 0x4, scoped, tag = 'scoped memory for tpu_custom_call.1']
    #allocation7 [shape = 'u8[32768]{0}', space=vmem, size = 0x8000, scoped, tag = 'input window, operand 3, single buffered']
    #allocation8 [shape = 'u8[32768]{0}', space=vmem, size = 0x8000, scoped, tag = 'input window, operand 5, single buffered']
    #allocation9 [shape = 's32[1]{0}', space=sflag, size = 0x4, scoped, tag = 'scoped memory for tpu_custom_call.1']
    #allocation10 [shape = 'u8[8192]{0}', space=vmem, size = 0x2000, scoped, tag = 'output window, operand 0, single buffered']
    %12 = vsyncpa [#allocation3], 0
    %13 = vsyncpa [#allocation6], 0
    %14 = vsyncpa [#allocation9], 0
    %15 = vsyncpa [#allocation4], 0
    // Predicated region
    $region2: #{tpu_custom_call.1} parent=1 // pred_check
      _
    $region3: #{tpu_custom_call.1} parent=1 // pred_check_branch
      %17 = sbr.rel (0) target = $region5
    $region4: #{tpu_custom_call.1} parent=1 // pred_region
      %s19 = ssub.s32 16384, 16384
      %20 = vsyncadd [#allocation3], %s19
      %s21 = sshll.u32 [#allocation2], 4
      %s22 = int_to_ptr.vmem [resolvable:$true] %s21
      %27 = dma.hbm_to_vmem [thread:$0]  %s0, 16384, %s22, [#allocation3], 128, 128, 8
    $region5: #{tpu_custom_call.1} parent=1 // pred_fallthru
      _
    // Predicated region
    $region6: #{tpu_custom_call.1} parent=1 // pred_check
      _
    $region7: #{tpu_custom_call.1} parent=1 // pred_check_branch
      %29 = sbr.rel (0) target = $region9
    $region8: #{tpu_custom_call.1} parent=1 // pred_region
      %s31 = ssub.s32 512, 512
      %32 = vsyncadd [#allocation6], %s31
      %s33 = sshll.u32 [#allocation5], 4
      %s34 = int_to_ptr.vmem [resolvable:$true] %s33
      %39 = dma.hbm_to_vmem [thread:$0]  %s1, 512, %s34, [#allocation6], 128, 128, 8
    $region9: #{tpu_custom_call.1} parent=1 // pred_fallthru
      _
    // Predicated region
    $region10: #{tpu_custom_call.1} parent=1 // pred_check
      _
    $region11: #{tpu_custom_call.1} parent=1 // pred_check_branch
      %41 = sbr.rel (0) target = $region13
    $region12: #{tpu_custom_call.1} parent=1 // pred_region
      _
    $region13: #{tpu_custom_call.1} parent=1 // pred_fallthru
      _
    // Predicated region
    $region14: #{tpu_custom_call.1} parent=1 // pred_check
      _
    $region15: #{tpu_custom_call.1} parent=1 // pred_check_branch
      %43 = sbr.rel (0) target = $region17
    $region16: #{tpu_custom_call.1} parent=1 // pred_region
      %s45 = ssub.s32 1024, 1024
      %46 = vsyncadd [#allocation6], %s45
      %s47 = sshll.u32 [#allocation7], 4
      %s48 = int_to_ptr.vmem [resolvable:$true] %s47
      %53 = dma.hbm_to_vmem [thread:$0]  %s3, 1024, %s48, [#allocation6], 128, 128, 8
    $region17: #{tpu_custom_call.1} parent=1 // pred_fallthru
      _
    // Predicated region
    $region18: #{tpu_custom_call.1} parent=1 // pred_check
      _
    $region19: #{tpu_custom_call.1} parent=1 // pred_check_branch
      %55 = sbr.rel (0) target = $region21
    $region20: #{tpu_custom_call.1} parent=1 // pred_region
      _
    $region21: #{tpu_custom_call.1} parent=1 // pred_fallthru
      _
    // Predicated region
    $region22: #{tpu_custom_call.1} parent=1 // pred_check
      _
    $region23: #{tpu_custom_call.1} parent=1 // pred_check_branch
      %57 = sbr.rel (0) target = $region25
    $region24: #{tpu_custom_call.1} parent=1 // pred_region
      %s59 = ssub.s32 1024, 1024
      %60 = vsyncadd [#allocation9], %s59
      %s61 = sshll.u32 [#allocation8], 4
      %s62 = int_to_ptr.vmem [resolvable:$true] %s61
      %67 = dma.hbm_to_vmem [thread:$0]  %s5, 1024, %s62, [#allocation9], 128, 128, 8
    $region25: #{tpu_custom_call.1} parent=1 // pred_fallthru
      _
    // Predicated region
    $region26: #{tpu_custom_call.1} parent=1 // pred_check
      _
    $region27: #{tpu_custom_call.1} parent=1 // pred_check_branch
      %69 = sbr.rel (0) target = $region29
    $region28: #{tpu_custom_call.1} parent=1 // pred_region
      _
    $region29: #{tpu_custom_call.1} parent=1 // pred_fallthru
      _
    // Predicated region
    $region30: #{tpu_custom_call.1} parent=1 // pred_check
      _
    $region31: #{tpu_custom_call.1} parent=1 // pred_check_branch
      %71 = sbr.rel (0) target = $region33
    $region32: #{tpu_custom_call.1} parent=1 // pred_region
      %72 = dma.done [#allocation3], 16384
    $region33: #{tpu_custom_call.1} parent=1 // pred_fallthru
      _
    // Predicated region
    $region34: #{tpu_custom_call.1} parent=1 // pred_check
      _
    $region35: #{tpu_custom_call.1} parent=1 // pred_check_branch
      %74 = sbr.rel (0) target = $region37
    $region36: #{tpu_custom_call.1} parent=1 // pred_region
      %75 = dma.done [#allocation6], 512
    $region37: #{tpu_custom_call.1} parent=1 // pred_fallthru
      _
    // Predicated region
    $region38: #{tpu_custom_call.1} parent=1 // pred_check
      _
    $region39: #{tpu_custom_call.1} parent=1 // pred_check_branch
      %77 = sbr.rel (0) target = $region41
    $region40: #{tpu_custom_call.1} parent=1 // pred_region
      %78 = dma.done [#allocation6], 1024
    $region41: #{tpu_custom_call.1} parent=1 // pred_fallthru
      _
    // Predicated region
    $region42: #{tpu_custom_call.1} parent=1 // pred_check
      _
    $region43: #{tpu_custom_call.1} parent=1 // pred_check_branch
      %80 = sbr.rel (0) target = $region45
    $region44: #{tpu_custom_call.1} parent=1 // pred_region
      %81 = dma.done [#allocation9], 1024
    $region45: #{tpu_custom_call.1} parent=1 // pred_fallthru
      _
    %v82 = vld [vmem:[#allocation2] sm:$0xff]
    %v83 = vld [vmem:[#allocation2 + $0x8] sm:$0xff]
    %v84 = vld [vmem:[#allocation2 + $0x10] sm:$0xff]
    %v85 = vld [vmem:[#allocation2 + $0x18] sm:$0xff]
    %v86 = vld [vmem:[#allocation2 + $0x40] sm:$0xff]
    %v87 = vld [vmem:[#allocation2 + $0x48] sm:$0xff]
    %v88 = vld [vmem:[#allocation2 + $0x50] sm:$0xff]
    %v89 = vld [vmem:[#allocation2 + $0x58] sm:$0xff]
    %v90 = vld [vmem:[#allocation2 + $0x80] sm:$0xff]
    %v91 = vld [vmem:[#allocation2 + $0x88] sm:$0xff]
    %v92 = vld [vmem:[#allocation2 + $0x90] sm:$0xff]
    %v93 = vld [vmem:[#allocation2 + $0x98] sm:$0xff]
    %v94 = vld [vmem:[#allocation2 + $0xc0] sm:$0xff]
    %v95 = vld [vmem:[#allocation2 + $0xc8] sm:$0xff]
    %v96 = vld [vmem:[#allocation2 + $0xd0] sm:$0xff]
    %v97 = vld [vmem:[#allocation2 + $0xd8] sm:$0xff]
    %v98 = vld [vmem:[#allocation2 + $0x100] sm:$0xff]
    %v99 = vld [vmem:[#allocation2 + $0x108] sm:$0xff]
    %v100 = vld [vmem:[#allocation2 + $0x110] sm:$0xff]
    %v101 = vld [vmem:[#allocation2 + $0x118] sm:$0xff]
    %v102 = vld [vmem:[#allocation2 + $0x140] sm:$0xff]
    %v103 = vld [vmem:[#allocation2 + $0x148] sm:$0xff]
    %v104 = vld [vmem:[#allocation2 + $0x150] sm:$0xff]
    %v105 = vld [vmem:[#allocation2 + $0x158] sm:$0xff]
    %v106 = vld [vmem:[#allocation2 + $0x180] sm:$0xff]
    %v107 = vld [vmem:[#allocation2 + $0x188] sm:$0xff]
    %v108 = vld [vmem:[#allocation2 + $0x190] sm:$0xff]
    %v109 = vld [vmem:[#allocation2 + $0x198] sm:$0xff]
    %v110 = vld [vmem:[#allocation2 + $0x1c0] sm:$0xff]
    %v111 = vld [vmem:[#allocation2 + $0x1c8] sm:$0xff]
    %v112 = vld [vmem:[#allocation2 + $0x1d0] sm:$0xff]
    %v113 = vld [vmem:[#allocation2 + $0x1d8] sm:$0xff]
    %v114 = vld [vmem:[#allocation2 + $0x200] sm:$0xff]
    %v115 = vld [vmem:[#allocation2 + $0x208] sm:$0xff]
    %v116 = vld [vmem:[#allocation2 + $0x210] sm:$0xff]
    %v117 = vld [vmem:[#allocation2 + $0x218] sm:$0xff]
    %v118 = vld [vmem:[#allocation2 + $0x240] sm:$0xff]
    %v119 = vld [vmem:[#allocation2 + $0x248] sm:$0xff]
    %v120 = vld [vmem:[#allocation2 + $0x250] sm:$0xff]
    %v121 = vld [vmem:[#allocation2 + $0x258] sm:$0xff]
    %v122 = vld [vmem:[#allocation2 + $0x280] sm:$0xff]
    %v123 = vld [vmem:[#allocation2 + $0x288] sm:$0xff]
    %v124 = vld [vmem:[#allocation2 + $0x290] sm:$0xff]
    %v125 = vld [vmem:[#allocation2 + $0x298] sm:$0xff]
    %v126 = vld [vmem:[#allocation2 + $0x2c0] sm:$0xff]
    %v127 = vld [vmem:[#allocation2 + $0x2c8] sm:$0xff]
    %v128 = vld [vmem:[#allocation2 + $0x2d0] sm:$0xff]
    %v129 = vld [vmem:[#allocation2 + $0x2d8] sm:$0xff]
    %v130 = vld [vmem:[#allocation2 + $0x300] sm:$0xff]
    %v131 = vld [vmem:[#allocation2 + $0x308] sm:$0xff]
    %v132 = vld [vmem:[#allocation2 + $0x310] sm:$0xff]
    %v133 = vld [vmem:[#allocation2 + $0x318] sm:$0xff]
    %v134 = vld [vmem:[#allocation2 + $0x340] sm:$0xff]
    %v135 = vld [vmem:[#allocation2 + $0x348] sm:$0xff]
    %v136 = vld [vmem:[#allocation2 + $0x350] sm:$0xff]
    %v137 = vld [vmem:[#allocation2 + $0x358] sm:$0xff]
    %v138 = vld [vmem:[#allocation2 + $0x380] sm:$0xff]
    %v139 = vld [vmem:[#allocation2 + $0x388] sm:$0xff]
    %v140 = vld [vmem:[#allocation2 + $0x390] sm:$0xff]
    %v141 = vld [vmem:[#allocation2 + $0x398] sm:$0xff]
    %v142 = vld [vmem:[#allocation2 + $0x3c0] sm:$0xff]
    %v143 = vld [vmem:[#allocation2 + $0x3c8] sm:$0xff]
    %v144 = vld [vmem:[#allocation2 + $0x3d0] sm:$0xff]
    %v145 = vld [vmem:[#allocation2 + $0x3d8] sm:$0xff]
    %vm146 = vcmask 523264
    %v147 = vsel %vm146, %v82, -inf
    %148 = vmax.xlane.f32.xlu0 %v147
    %v149 = vpop.xlane.xlu0 %148
    %v150 = vsel %vm146, %v83, -inf
    %151 = vmax.xlane.f32.xlu0 %v150
    %v152 = vpop.xlane.xlu0 %151
    %v153 = vsel %vm146, %v84, -inf
    %154 = vmax.xlane.f32.xlu0 %v153
    %v155 = vpop.xlane.xlu0 %154
    %v156 = vsel %vm146, %v85, -inf
    %157 = vmax.xlane.f32.xlu0 %v156
    %v158 = vpop.xlane.xlu0 %157
    %v159 = vsel %vm146, %v86, -inf
    %160 = vmax.xlane.f32.xlu0 %v159
    %v161 = vpop.xlane.xlu0 %160
    %v162 = vsel %vm146, %v87, -inf
    %163 = vmax.xlane.f32.xlu0 %v162
    %v164 = vpop.xlane.xlu0 %163
    %v165 = vsel %vm146, %v88, -inf
    %166 = vmax.xlane.f32.xlu0 %v165
    %v167 = vpop.xlane.xlu0 %166
    %v168 = vsel %vm146, %v89, -inf
    %169 = vmax.xlane.f32.xlu0 %v168
    %v170 = vpop.xlane.xlu0 %169
    %v171 = vsel %vm146, %v90, -inf
    %172 = vmax.xlane.f32.xlu0 %v171
    %v173 = vpop.xlane.xlu0 %172
    %v174 = vsel %vm146, %v91, -inf
    %175 = vmax.xlane.f32.xlu0 %v174
    %v176 = vpop.xlane.xlu0 %175
    %v177 = vsel %vm146, %v92, -inf
    %178 = vmax.xlane.f32.xlu0 %v177
    %v179 = vpop.xlane.xlu0 %178
    %v180 = vsel %vm146, %v93, -inf
    %181 = vmax.xlane.f32.xlu0 %v180
    %v182 = vpop.xlane.xlu0 %181
    %v183 = vsel %vm146, %v94, -inf
    %184 = vmax.xlane.f32.xlu0 %v183
    %v185 = vpop.xlane.xlu0 %184
    %v186 = vsel %vm146, %v95, -inf
    %187 = vmax.xlane.f32.xlu0 %v186
    %v188 = vpop.xlane.xlu0 %187
    %v189 = vsel %vm146, %v96, -inf
    %190 = vmax.xlane.f32.xlu0 %v189
    %v191 = vpop.xlane.xlu0 %190
    %v192 = vsel %vm146, %v97, -inf
    %193 = vmax.xlane.f32.xlu0 %v192
    %v194 = vpop.xlane.xlu0 %193
    %v195 = vsel %vm146, %v98, -inf
    %196 = vmax.xlane.f32.xlu0 %v195
    %v197 = vpop.xlane.xlu0 %196
    %v198 = vsel %vm146, %v99, -inf
    %199 = vmax.xlane.f32.xlu0 %v198
    %v200 = vpop.xlane.xlu0 %199
    %v201 = vsel %vm146, %v100, -inf
    %202 = vmax.xlane.f32.xlu0 %v201
    %v203 = vpop.xlane.xlu0 %202
    %v204 = vsel %vm146, %v101, -inf
    %205 = vmax.xlane.f32.xlu0 %v204
    %v206 = vpop.xlane.xlu0 %205
    %v207 = vsel %vm146, %v102, -inf
    %208 = vmax.xlane.f32.xlu0 %v207
    %v209 = vpop.xlane.xlu0 %208
    %v210 = vsel %vm146, %v103, -inf
    %211 = vmax.xlane.f32.xlu0 %v210
    %v212 = vpop.xlane.xlu0 %211
    %v213 = vsel %vm146, %v104, -inf
    %214 = vmax.xlane.f32.xlu0 %v213
    %v215 = vpop.xlane.xlu0 %214
    %v216 = vsel %vm146, %v105, -inf
    %217 = vmax.xlane.f32.xlu0 %v216
    %v218 = vpop.xlane.xlu0 %217
    %v219 = vsel %vm146, %v106, -inf
    %220 = vmax.xlane.f32.xlu0 %v219
    %v221 = vpop.xlane.xlu0 %220
    %v222 = vsel %vm146, %v107, -inf
    %223 = vmax.xlane.f32.xlu0 %v222
    %v224 = vpop.xlane.xlu0 %223
    %v225 = vsel %vm146, %v108, -inf
    %226 = vmax.xlane.f32.xlu0 %v225
    %v227 = vpop.xlane.xlu0 %226
    %v228 = vsel %vm146, %v109, -inf
    %229 = vmax.xlane.f32.xlu0 %v228
    %v230 = vpop.xlane.xlu0 %229
    %v231 = vsel %vm146, %v110, -inf
    %232 = vmax.xlane.f32.xlu0 %v231
    %v233 = vpop.xlane.xlu0 %232
    %v234 = vsel %vm146, %v111, -inf
    %235 = vmax.xlane.f32.xlu0 %v234
    %v236 = vpop.xlane.xlu0 %235
    %v237 = vsel %vm146, %v112, -inf
    %238 = vmax.xlane.f32.xlu0 %v237
    %v239 = vpop.xlane.xlu0 %238
    %v240 = vsel %vm146, %v113, -inf
    %241 = vmax.xlane.f32.xlu0 %v240
    %v242 = vpop.xlane.xlu0 %241
    %v243 = vsel %vm146, %v114, -inf
    %244 = vmax.xlane.f32.xlu0 %v243
    %v245 = vpop.xlane.xlu0 %244
    %v246 = vsel %vm146, %v115, -inf
    %247 = vmax.xlane.f32.xlu0 %v246
    %v248 = vpop.xlane.xlu0 %247
    %v249 = vsel %vm146, %v116, -inf
    %250 = vmax.xlane.f32.xlu0 %v249
    %v251 = vpop.xlane.xlu0 %250
    %v252 = vsel %vm146, %v117, -inf
    %253 = vmax.xlane.f32.xlu0 %v252
    %v254 = vpop.xlane.xlu0 %253
    %v255 = vsel %vm146, %v118, -inf
    %256 = vmax.xlane.f32.xlu0 %v255
    %v257 = vpop.xlane.xlu0 %256
    %v258 = vsel %vm146, %v119, -inf
    %259 = vmax.xlane.f32.xlu0 %v258
    %v260 = vpop.xlane.xlu0 %259
    %v261 = vsel %vm146, %v120, -inf
    %262 = vmax.xlane.f32.xlu0 %v261
    %v263 = vpop.xlane.xlu0 %262
    %v264 = vsel %vm146, %v121, -inf
    %265 = vmax.xlane.f32.xlu0 %v264
    %v266 = vpop.xlane.xlu0 %265
    %v267 = vsel %vm146, %v122, -inf
    %268 = vmax.xlane.f32.xlu0 %v267
    %v269 = vpop.xlane.xlu0 %268
    %v270 = vsel %vm146, %v123, -inf
    %271 = vmax.xlane.f32.xlu0 %v270
    %v272 = vpop.xlane.xlu0 %271
    %v273 = vsel %vm146, %v124, -inf
    %274 = vmax.xlane.f32.xlu0 %v273
    %v275 = vpop.xlane.xlu0 %274
    %v276 = vsel %vm146, %v125, -inf
    %277 = vmax.xlane.f32.xlu0 %v276
    %v278 = vpop.xlane.xlu0 %277
    %v279 = vsel %vm146, %v126, -inf
    %280 = vmax.xlane.f32.xlu0 %v279
    %v281 = vpop.xlane.xlu0 %280
    %v282 = vsel %vm146, %v127, -inf
    %283 = vmax.xlane.f32.xlu0 %v282
    %v284 = vpop.xlane.xlu0 %283
    %v285 = vsel %vm146, %v128, -inf
    %286 = vmax.xlane.f32.xlu0 %v285
    %v287 = vpop.xlane.xlu0 %286
    %v288 = vsel %vm146, %v129, -inf
    %289 = vmax.xlane.f32.xlu0 %v288
    %v290 = vpop.xlane.xlu0 %289
    %v291 = vsel %vm146, %v130, -inf
    %292 = vmax.xlane.f32.xlu0 %v291
    %v293 = vpop.xlane.xlu0 %292
    %v294 = vsel %vm146, %v131, -inf
    %295 = vmax.xlane.f32.xlu0 %v294
    %v296 = vpop.xlane.xlu0 %295
    %v297 = vsel %vm146, %v132, -inf
    %298 = vmax.xlane.f32.xlu0 %v297
    %v299 = vpop.xlane.xlu0 %298
    %v300 = vsel %vm146, %v133, -inf
    %301 = vmax.xlane.f32.xlu0 %v300
    %v302 = vpop.xlane.xlu0 %301
    %v303 = vsel %vm146, %v134, -inf
    %304 = vmax.xlane.f32.xlu0 %v303
    %v305 = vpop.xlane.xlu0 %304
    %v306 = vsel %vm146, %v135, -inf
    %307 = vmax.xlane.f32.xlu0 %v306
    %v308 = vpop.xlane.xlu0 %307
    %v309 = vsel %vm146, %v136, -inf
    %310 = vmax.xlane.f32.xlu0 %v309
    %v311 = vpop.xlane.xlu0 %310
    %v312 = vsel %vm146, %v137, -inf
    %313 = vmax.xlane.f32.xlu0 %v312
    %v314 = vpop.xlane.xlu0 %313
    %v315 = vsel %vm146, %v138, -inf
    %316 = vmax.xlane.f32.xlu0 %v315
    %v317 = vpop.xlane.xlu0 %316
    %v318 = vsel %vm146, %v139, -inf
    %319 = vmax.xlane.f32.xlu0 %v318
    %v320 = vpop.xlane.xlu0 %319
    %v321 = vsel %vm146, %v140, -inf
    %322 = vmax.xlane.f32.xlu0 %v321
    %v323 = vpop.xlane.xlu0 %322
    %v324 = vsel %vm146, %v141, -inf
    %325 = vmax.xlane.f32.xlu0 %v324
    %v326 = vpop.xlane.xlu0 %325
    %v327 = vsel %vm146, %v142, -inf
    %328 = vmax.xlane.f32.xlu0 %v327
    %v329 = vpop.xlane.xlu0 %328
    %v330 = vsel %vm146, %v143, -inf
    %331 = vmax.xlane.f32.xlu0 %v330
    %v332 = vpop.xlane.xlu0 %331
    %v333 = vsel %vm146, %v144, -inf
    %334 = vmax.xlane.f32.xlu0 %v333
    %v335 = vpop.xlane.xlu0 %334
    %v336 = vsel %vm146, %v145, -inf
    %337 = vmax.xlane.f32.xlu0 %v336
    %v338 = vpop.xlane.xlu0 %337
    %s339 = scalar_lea.vmem [#allocation2], 32
    %v340 = vld [vmem:[%s339] sm:$0xff]
    %v341 = vld [vmem:[%s339 + $0x8] sm:$0xff]
    %v342 = vld [vmem:[%s339 + $0x10] sm:$0xff]
    %v343 = vld [vmem:[%s339 + $0x18] sm:$0xff]
    %v344 = vld [vmem:[%s339 + $0x40] sm:$0xff]
    %v345 = vld [vmem:[%s339 + $0x48] sm:$0xff]
    %v346 = vld [vmem:[%s339 + $0x50] sm:$0xff]
    %v347 = vld [vmem:[%s339 + $0x58] sm:$0xff]
    %v348 = vld [vmem:[%s339 + $0x80] sm:$0xff]
    %v349 = vld [vmem:[%s339 + $0x88] sm:$0xff]
    %v350 = vld [vmem:[%s339 + $0x90] sm:$0xff]
    %v351 = vld [vmem:[%s339 + $0x98] sm:$0xff]
    %v352 = vld [vmem:[%s339 + $0xc0] sm:$0xff]
    %v353 = vld [vmem:[%s339 + $0xc8] sm:$0xff]
    %v354 = vld [vmem:[%s339 + $0xd0] sm:$0xff]
    %v355 = vld [vmem:[%s339 + $0xd8] sm:$0xff]
    %v356 = vld [vmem:[%s339 + $0x100] sm:$0xff]
    %v357 = vld [vmem:[%s339 + $0x108] sm:$0xff]
    %v358 = vld [vmem:[%s339 + $0x110] sm:$0xff]
    %v359 = vld [vmem:[%s339 + $0x118] sm:$0xff]
    %v360 = vld [vmem:[%s339 + $0x140] sm:$0xff]
    %v361 = vld [vmem:[%s339 + $0x148] sm:$0xff]
    %v362 = vld [vmem:[%s339 + $0x150] sm:$0xff]
    %v363 = vld [vmem:[%s339 + $0x158] sm:$0xff]
    %v364 = vld [vmem:[%s339 + $0x180] sm:$0xff]
    %v365 = vld [vmem:[%s339 + $0x188] sm:$0xff]
    %v366 = vld [vmem:[%s339 + $0x190] sm:$0xff]
    %v367 = vld [vmem:[%s339 + $0x198] sm:$0xff]
    %v368 = vld [vmem:[%s339 + $0x1c0] sm:$0xff]
    %v369 = vld [vmem:[%s339 + $0x1c8] sm:$0xff]
    %v370 = vld [vmem:[%s339 + $0x1d0] sm:$0xff]
    %v371 = vld [vmem:[%s339 + $0x1d8] sm:$0xff]
    %v372 = vld [vmem:[%s339 + $0x200] sm:$0xff]
    %v373 = vld [vmem:[%s339 + $0x208] sm:$0xff]
    %v374 = vld [vmem:[%s339 + $0x210] sm:$0xff]
    %v375 = vld [vmem:[%s339 + $0x218] sm:$0xff]
    %v376 = vld [vmem:[%s339 + $0x240] sm:$0xff]
    %v377 = vld [vmem:[%s339 + $0x248] sm:$0xff]
    %v378 = vld [vmem:[%s339 + $0x250] sm:$0xff]
    %v379 = vld [vmem:[%s339 + $0x258] sm:$0xff]
    %v380 = vld [vmem:[%s339 + $0x280] sm:$0xff]
    %v381 = vld [vmem:[%s339 + $0x288] sm:$0xff]
    %v382 = vld [vmem:[%s339 + $0x290] sm:$0xff]
    %v383 = vld [vmem:[%s339 + $0x298] sm:$0xff]
    %v384 = vld [vmem:[%s339 + $0x2c0] sm:$0xff]
    %v385 = vld [vmem:[%s339 + $0x2c8] sm:$0xff]
    %v386 = vld [vmem:[%s339 + $0x2d0] sm:$0xff]
    %v387 = vld [vmem:[%s339 + $0x2d8] sm:$0xff]
    %v388 = vld [vmem:[%s339 + $0x300] sm:$0xff]
    %v389 = vld [vmem:[%s339 + $0x308] sm:$0xff]
    %v390 = vld [vmem:[%s339 + $0x310] sm:$0xff]
    %v391 = vld [vmem:[%s339 + $0x318] sm:$0xff]
    %v392 = vld [vmem:[%s339 + $0x340] sm:$0xff]
    %v393 = vld [vmem:[%s339 + $0x348] sm:$0xff]
    %v394 = vld [vmem:[%s339 + $0x350] sm:$0xff]
    %v395 = vld [vmem:[%s339 + $0x358] sm:$0xff]
    %v396 = vld [vmem:[%s339 + $0x380] sm:$0xff]
    %v397 = vld [vmem:[%s339 + $0x388] sm:$0xff]
    %v398 = vld [vmem:[%s339 + $0x390] sm:$0xff]
    %v399 = vld [vmem:[%s339 + $0x398] sm:$0xff]
    %v400 = vld [vmem:[%s339 + $0x3c0] sm:$0xff]
    %v401 = vld [vmem:[%s339 + $0x3c8] sm:$0xff]
    %v402 = vld [vmem:[%s339 + $0x3d0] sm:$0xff]
    %v403 = vld [vmem:[%s339 + $0x3d8] sm:$0xff]
    %v404 = vsel %vm146, %v340, -inf
    %405 = vmax.xlane.f32.xlu0 %v404
    %v406 = vpop.xlane.xlu0 %405
    %v407 = vsel %vm146, %v341, -inf
    %408 = vmax.xlane.f32.xlu0 %v407
    %v409 = vpop.xlane.xlu0 %408
    %v410 = vsel %vm146, %v342, -inf
    %411 = vmax.xlane.f32.xlu0 %v410
    %v412 = vpop.xlane.xlu0 %411
    %v413 = vsel %vm146, %v343, -inf
    %414 = vmax.xlane.f32.xlu0 %v413
    %v415 = vpop.xlane.xlu0 %414
    %v416 = vsel %vm146, %v344, -inf
    %417 = vmax.xlane.f32.xlu0 %v416
    %v418 = vpop.xlane.xlu0 %417
    %v419 = vsel %vm146, %v345, -inf
    %420 = vmax.xlane.f32.xlu0 %v419
    %v421 = vpop.xlane.xlu0 %420
    %v422 = vsel %vm146, %v346, -inf
    %423 = vmax.xlane.f32.xlu0 %v422
    %v424 = vpop.xlane.xlu0 %423
    %v425 = vsel %vm146, %v347, -inf
    %426 = vmax.xlane.f32.xlu0 %v425
    %v427 = vpop.xlane.xlu0 %426
    %v428 = vsel %vm146, %v348, -inf
    %429 = vmax.xlane.f32.xlu0 %v428
    %v430 = vpop.xlane.xlu0 %429
    %v431 = vsel %vm146, %v349, -inf
    %432 = vmax.xlane.f32.xlu0 %v431
    %v433 = vpop.xlane.xlu0 %432
    %v434 = vsel %vm146, %v350, -inf
    %435 = vmax.xlane.f32.xlu0 %v434
    %v436 = vpop.xlane.xlu0 %435
    %v437 = vsel %vm146, %v351, -inf
    %438 = vmax.xlane.f32.xlu0 %v437
    %v439 = vpop.xlane.xlu0 %438
    %v440 = vsel %vm146, %v352, -inf
    %441 = vmax.xlane.f32.xlu0 %v440
    %v442 = vpop.xlane.xlu0 %441
    %v443 = vsel %vm146, %v353, -inf
    %444 = vmax.xlane.f32.xlu0 %v443
    %v445 = vpop.xlane.xlu0 %444
    %v446 = vsel %vm146, %v354, -inf
    %447 = vmax.xlane.f32.xlu0 %v446
    %v448 = vpop.xlane.xlu0 %447
    %v449 = vsel %vm146, %v355, -inf
    %450 = vmax.xlane.f32.xlu0 %v449
    %v451 = vpop.xlane.xlu0 %450
    %v452 = vsel %vm146, %v356, -inf
    %453 = vmax.xlane.f32.xlu0 %v452
    %v454 = vpop.xlane.xlu0 %453
    %v455 = vsel %vm146, %v357, -inf
    %456 = vmax.xlane.f32.xlu0 %v455
    %v457 = vpop.xlane.xlu0 %456
    %v458 = vsel %vm146, %v358, -inf
    %459 = vmax.xlane.f32.xlu0 %v458
    %v460 = vpop.xlane.xlu0 %459
    %v461 = vsel %vm146, %v359, -inf
    %462 = vmax.xlane.f32.xlu0 %v461
    %v463 = vpop.xlane.xlu0 %462
    %v464 = vsel %vm146, %v360, -inf
    %465 = vmax.xlane.f32.xlu0 %v464
    %v466 = vpop.xlane.xlu0 %465
    %v467 = vsel %vm146, %v361, -inf
    %468 = vmax.xlane.f32.xlu0 %v467
    %v469 = vpop.xlane.xlu0 %468
    %v470 = vsel %vm146, %v362, -inf
    %471 = vmax.xlane.f32.xlu0 %v470
    %v472 = vpop.xlane.xlu0 %471
    %v473 = vsel %vm146, %v363, -inf
    %474 = vmax.xlane.f32.xlu0 %v473
    %v475 = vpop.xlane.xlu0 %474
    %v476 = vsel %vm146, %v364, -inf
    %477 = vmax.xlane.f32.xlu0 %v476
    %v478 = vpop.xlane.xlu0 %477
    %v479 = vsel %vm146, %v365, -inf
    %480 = vmax.xlane.f32.xlu0 %v479
    %v481 = vpop.xlane.xlu0 %480
    %v482 = vsel %vm146, %v366, -inf
    %483 = vmax.xlane.f32.xlu0 %v482
    %v484 = vpop.xlane.xlu0 %483
    %v485 = vsel %vm146, %v367, -inf
    %486 = vmax.xlane.f32.xlu0 %v485
    %v487 = vpop.xlane.xlu0 %486
    %v488 = vsel %vm146, %v368, -inf
    %489 = vmax.xlane.f32.xlu0 %v488
    %v490 = vpop.xlane.xlu0 %489
    %v491 = vsel %vm146, %v369, -inf
    %492 = vmax.xlane.f32.xlu0 %v491
    %v493 = vpop.xlane.xlu0 %492
    %v494 = vsel %vm146, %v370, -inf
    %495 = vmax.xlane.f32.xlu0 %v494
    %v496 = vpop.xlane.xlu0 %495
    %v497 = vsel %vm146, %v371, -inf
    %498 = vmax.xlane.f32.xlu0 %v497
    %v499 = vpop.xlane.xlu0 %498
    %v500 = vsel %vm146, %v372, -inf
    %501 = vmax.xlane.f32.xlu0 %v500
    %v502 = vpop.xlane.xlu0 %501
    %v503 = vsel %vm146, %v373, -inf
    %504 = vmax.xlane.f32.xlu0 %v503
    %v505 = vpop.xlane.xlu0 %504
    %v506 = vsel %vm146, %v374, -inf
    %507 = vmax.xlane.f32.xlu0 %v506
    %v508 = vpop.xlane.xlu0 %507
    %v509 = vsel %vm146, %v375, -inf
    %510 = vmax.xlane.f32.xlu0 %v509
    %v511 = vpop.xlane.xlu0 %510
    %v512 = vsel %vm146, %v376, -inf
    %513 = vmax.xlane.f32.xlu0 %v512
    %v514 = vpop.xlane.xlu0 %513
    %v515 = vsel %vm146, %v377, -inf
    %516 = vmax.xlane.f32.xlu0 %v515
    %v517 = vpop.xlane.xlu0 %516
    %v518 = vsel %vm146, %v378, -inf
    %519 = vmax.xlane.f32.xlu0 %v518
    %v520 = vpop.xlane.xlu0 %519
    %v521 = vsel %vm146, %v379, -inf
    %522 = vmax.xlane.f32.xlu0 %v521
    %v523 = vpop.xlane.xlu0 %522
    %v524 = vsel %vm146, %v380, -inf
    %525 = vmax.xlane.f32.xlu0 %v524
    %v526 = vpop.xlane.xlu0 %525
    %v527 = vsel %vm146, %v381, -inf
    %528 = vmax.xlane.f32.xlu0 %v527
    %v529 = vpop.xlane.xlu0 %528
    %v530 = vsel %vm146, %v382, -inf
    %531 = vmax.xlane.f32.xlu0 %v530
    %v532 = vpop.xlane.xlu0 %531
    %v533 = vsel %vm146, %v383, -inf
    %534 = vmax.xlane.f32.xlu0 %v533
    %v535 = vpop.xlane.xlu0 %534
    %v536 = vsel %vm146, %v384, -inf
    %537 = vmax.xlane.f32.xlu0 %v536
    %v538 = vpop.xlane.xlu0 %537
    %v539 = vsel %vm146, %v385, -inf
    %540 = vmax.xlane.f32.xlu0 %v539
    %v541 = vpop.xlane.xlu0 %540
    %v542 = vsel %vm146, %v386, -inf
    %543 = vmax.xlane.f32.xlu0 %v542
    %v544 = vpop.xlane.xlu0 %543
    %v545 = vsel %vm146, %v387, -inf
    %546 = vmax.xlane.f32.xlu0 %v545
    %v547 = vpop.xlane.xlu0 %546
    %v548 = vsel %vm146, %v388, -inf
    %549 = vmax.xlane.f32.xlu0 %v548
    %v550 = vpop.xlane.xlu0 %549
    %v551 = vsel %vm146, %v389, -inf
    %552 = vmax.xlane.f32.xlu0 %v551
    %v553 = vpop.xlane.xlu0 %552
    %v554 = vsel %vm146, %v390, -inf
    %555 = vmax.xlane.f32.xlu0 %v554
    %v556 = vpop.xlane.xlu0 %555
    %v557 = vsel %vm146, %v391, -inf
    %558 = vmax.xlane.f32.xlu0 %v557
    %v559 = vpop.xlane.xlu0 %558
    %v560 = vsel %vm146, %v392, -inf
    %561 = vmax.xlane.f32.xlu0 %v560
    %v562 = vpop.xlane.xlu0 %561
    %v563 = vsel %vm146, %v393, -inf
    %564 = vmax.xlane.f32.xlu0 %v563
    %v565 = vpop.xlane.xlu0 %564
    %v566 = vsel %vm146, %v394, -inf
    %567 = vmax.xlane.f32.xlu0 %v566
    %v568 = vpop.xlane.xlu0 %567
    %v569 = vsel %vm146, %v395, -inf
    %570 = vmax.xlane.f32.xlu0 %v569
    %v571 = vpop.xlane.xlu0 %570
    %v572 = vsel %vm146, %v396, -inf
    %573 = vmax.xlane.f32.xlu0 %v572
    %v574 = vpop.xlane.xlu0 %573
    %v575 = vsel %vm146, %v397, -inf
    %576 = vmax.xlane.f32.xlu0 %v575
    %v577 = vpop.xlane.xlu0 %576
    %v578 = vsel %vm146, %v398, -inf
    %579 = vmax.xlane.f32.xlu0 %v578
    %v580 = vpop.xlane.xlu0 %579
    %v581 = vsel %vm146, %v399, -inf
    %582 = vmax.xlane.f32.xlu0 %v581
    %v583 = vpop.xlane.xlu0 %582
    %v584 = vsel %vm146, %v400, -inf
    %585 = vmax.xlane.f32.xlu0 %v584
    %v586 = vpop.xlane.xlu0 %585
    %v587 = vsel %vm146, %v401, -inf
    %588 = vmax.xlane.f32.xlu0 %v587
    %v589 = vpop.xlane.xlu0 %588
    %v590 = vsel %vm146, %v402, -inf
    %591 = vmax.xlane.f32.xlu0 %v590
    %v592 = vpop.xlane.xlu0 %591
    %v593 = vsel %vm146, %v403, -inf
    %594 = vmax.xlane.f32.xlu0 %v593
    %v595 = vpop.xlane.xlu0 %594
    %v596 = vmax.f32 %v149, %v406
    %v597 = vmax.f32 %v152, %v409
    %v598 = vmax.f32 %v155, %v412
    %v599 = vmax.f32 %v158, %v415
    %v600 = vmax.f32 %v161, %v418
    %v601 = vmax.f32 %v164, %v421
    %v602 = vmax.f32 %v167, %v424
    %v603 = vmax.f32 %v170, %v427
    %v604 = vmax.f32 %v173, %v430
    %v605 = vmax.f32 %v176, %v433
    %v606 = vmax.f32 %v179, %v436
    %v607 = vmax.f32 %v182, %v439
    %v608 = vmax.f32 %v185, %v442
    %v609 = vmax.f32 %v188, %v445
    %v610 = vmax.f32 %v191, %v448
    %v611 = vmax.f32 %v194, %v451
    %v612 = vmax.f32 %v197, %v454
    %v613 = vmax.f32 %v200, %v457
    %v614 = vmax.f32 %v203, %v460
    %v615 = vmax.f32 %v206, %v463
    %v616 = vmax.f32 %v209, %v466
    %v617 = vmax.f32 %v212, %v469
    %v618 = vmax.f32 %v215, %v472
    %v619 = vmax.f32 %v218, %v475
    %v620 = vmax.f32 %v221, %v478
    %v621 = vmax.f32 %v224, %v481
    %v622 = vmax.f32 %v227, %v484
    %v623 = vmax.f32 %v230, %v487
    %v624 = vmax.f32 %v233, %v490
    %v625 = vmax.f32 %v236, %v493
    %v626 = vmax.f32 %v239, %v496
    %v627 = vmax.f32 %v242, %v499
    %v628 = vmax.f32 %v245, %v502
    %v629 = vmax.f32 %v248, %v505
    %v630 = vmax.f32 %v251, %v508
    %v631 = vmax.f32 %v254, %v511
    %v632 = vmax.f32 %v257, %v514
    %v633 = vmax.f32 %v260, %v517
    %v634 = vmax.f32 %v263, %v520
    %v635 = vmax.f32 %v266, %v523
    %v636 = vmax.f32 %v269, %v526
    %v637 = vmax.f32 %v272, %v529
    %v638 = vmax.f32 %v275, %v532
    %v639 = vmax.f32 %v278, %v535
    %v640 = vmax.f32 %v281, %v538
    %v641 = vmax.f32 %v284, %v541
    %v642 = vmax.f32 %v287, %v544
    %v643 = vmax.f32 %v290, %v547
    %v644 = vmax.f32 %v293, %v550
    %v645 = vmax.f32 %v296, %v553
    %v646 = vmax.f32 %v299, %v556
    %v647 = vmax.f32 %v302, %v559
    %v648 = vmax.f32 %v305, %v562
    %v649 = vmax.f32 %v308, %v565
    %v650 = vmax.f32 %v311, %v568
    %v651 = vmax.f32 %v314, %v571
    %v652 = vmax.f32 %v317, %v574
    %v653 = vmax.f32 %v320, %v577
    %v654 = vmax.f32 %v323, %v580
    %v655 = vmax.f32 %v326, %v583
    %v656 = vmax.f32 %v329, %v586
    %v657 = vmax.f32 %v332, %v589
    %v658 = vmax.f32 %v335, %v592
    %v659 = vmax.f32 %v338, %v595
    %v660 = vld [vmem:[#allocation5] sm:$0xff]
    %v661 = vld [vmem:[#allocation5 + $0x8] sm:$0xff]
    %v662 = vld [vmem:[#allocation5 + $0x10] sm:$0xff]
    %v663 = vld [vmem:[#allocation5 + $0x18] sm:$0xff]
    %v664 = vld [vmem:[%s2] sm:$0x1]
    %v666 = vlaneseq
    %v667 = vshrl.u32 %v666, 7
    %v668 = vsub.s32 0, %v667
    %v669 = vrot.slane %v664, %v668
    %v735 = vlaneseq
    %v736 = vand.u32 %v735, 127
    %v737 = vlaneseq
    %v738 = vshrl.u32 %v737, 7
    %v739 = vsub.s32 %v736, %v738
    %v740 = vrot.slane %v596, %v739
    %v741 = vadd.s32 %v736, 4294967288
    %v742 = vlaneseq
    %v743 = vshrl.u32 %v742, 7
    %v744 = vsub.s32 %v741, %v743
    %v745 = vrot.slane %v597, %v744
    %vm746 = vcmask 130112
    %v747 = vsel %vm746, %v745, %v740
    %v748 = vadd.s32 %v736, 4294967280
    %v749 = vlaneseq
    %v750 = vshrl.u32 %v749, 7
    %v751 = vsub.s32 %v748, %v750
    %v752 = vrot.slane %v598, %v751
    %vm753 = vcmask 195712
    %v754 = vsel %vm753, %v752, %v747
    %v755 = vadd.s32 %v736, 4294967272
    %v756 = vlaneseq
    %v757 = vshrl.u32 %v756, 7
    %v758 = vsub.s32 %v755, %v757
    %v759 = vrot.slane %v599, %v758
    %vm760 = vcmask 261312
    %v761 = vsel %vm760, %v759, %v754
    %v762 = vlaneseq
    %v763 = vshrl.u32 %v762, 7
    %v764 = vsub.s32 %v736, %v763
    %v765 = vrot.slane %v600, %v764
    %v766 = vlaneseq
    %v767 = vshrl.u32 %v766, 7
    %v768 = vsub.s32 %v741, %v767
    %v769 = vrot.slane %v601, %v768
    %v770 = vsel %vm746, %v769, %v765
    %v771 = vlaneseq
    %v772 = vshrl.u32 %v771, 7
    %v773 = vsub.s32 %v748, %v772
    %v774 = vrot.slane %v602, %v773
    %v775 = vsel %vm753, %v774, %v770
    %v776 = vlaneseq
    %v777 = vshrl.u32 %v776, 7
    %v778 = vsub.s32 %v755, %v777
    %v779 = vrot.slane %v603, %v778
    %v780 = vsel %vm760, %v779, %v775
    %v781 = vlaneseq
    %v782 = vshrl.u32 %v781, 7
    %v783 = vsub.s32 %v736, %v782
    %v784 = vrot.slane %v604, %v783
    %v785 = vlaneseq
    %v786 = vshrl.u32 %v785, 7
    %v787 = vsub.s32 %v741, %v786
    %v788 = vrot.slane %v605, %v787
    %v789 = vsel %vm746, %v788, %v784
    %v790 = vlaneseq
    %v791 = vshrl.u32 %v790, 7
    %v792 = vsub.s32 %v748, %v791
    %v793 = vrot.slane %v606, %v792
    %v794 = vsel %vm753, %v793, %v789
    %v795 = vlaneseq
    %v796 = vshrl.u32 %v795, 7
    %v797 = vsub.s32 %v755, %v796
    %v798 = vrot.slane %v607, %v797
    %v799 = vsel %vm760, %v798, %v794
    %v800 = vlaneseq
    %v801 = vshrl.u32 %v800, 7
    %v802 = vsub.s32 %v736, %v801
    %v803 = vrot.slane %v608, %v802
    %v804 = vlaneseq
    %v805 = vshrl.u32 %v804, 7
    %v806 = vsub.s32 %v741, %v805
    %v807 = vrot.slane %v609, %v806
    %v808 = vsel %vm746, %v807, %v803
    %v809 = vlaneseq
    %v810 = vshrl.u32 %v809, 7
    %v811 = vsub.s32 %v748, %v810
    %v812 = vrot.slane %v610, %v811
    %v813 = vsel %vm753, %v812, %v808
    %v814 = vlaneseq
    %v815 = vshrl.u32 %v814, 7
    %v816 = vsub.s32 %v755, %v815
    %v817 = vrot.slane %v611, %v816
    %v818 = vsel %vm760, %v817, %v813
    %v819 = vlaneseq
    %v820 = vshrl.u32 %v819, 7
    %v821 = vsub.s32 %v736, %v820
    %v822 = vrot.slane %v612, %v821
    %v823 = vlaneseq
    %v824 = vshrl.u32 %v823, 7
    %v825 = vsub.s32 %v741, %v824
    %v826 = vrot.slane %v613, %v825
    %v827 = vsel %vm746, %v826, %v822
    %v828 = vlaneseq
    %v829 = vshrl.u32 %v828, 7
    %v830 = vsub.s32 %v748, %v829
    %v831 = vrot.slane %v614, %v830
    %v832 = vsel %vm753, %v831, %v827
    %v833 = vlaneseq
    %v834 = vshrl.u32 %v833, 7
    %v835 = vsub.s32 %v755, %v834
    %v836 = vrot.slane %v615, %v835
    %v837 = vsel %vm760, %v836, %v832
    %v838 = vlaneseq
    %v839 = vshrl.u32 %v838, 7
    %v840 = vsub.s32 %v736, %v839
    %v841 = vrot.slane %v616, %v840
    %v842 = vlaneseq
    %v843 = vshrl.u32 %v842, 7
    %v844 = vsub.s32 %v741, %v843
    %v845 = vrot.slane %v617, %v844
    %v846 = vsel %vm746, %v845, %v841
    %v847 = vlaneseq
    %v848 = vshrl.u32 %v847, 7
    %v849 = vsub.s32 %v748, %v848
    %v850 = vrot.slane %v618, %v849
    %v851 = vsel %vm753, %v850, %v846
    %v852 = vlaneseq
    %v853 = vshrl.u32 %v852, 7
    %v854 = vsub.s32 %v755, %v853
    %v855 = vrot.slane %v619, %v854
    %v856 = vsel %vm760, %v855, %v851
    %v857 = vlaneseq
    %v858 = vshrl.u32 %v857, 7
    %v859 = vsub.s32 %v736, %v858
    %v860 = vrot.slane %v620, %v859
    %v861 = vlaneseq
    %v862 = vshrl.u32 %v861, 7
    %v863 = vsub.s32 %v741, %v862
    %v864 = vrot.slane %v621, %v863
    %v865 = vsel %vm746, %v864, %v860
    %v866 = vlaneseq
    %v867 = vshrl.u32 %v866, 7
    %v868 = vsub.s32 %v748, %v867
    %v869 = vrot.slane %v622, %v868
    %v870 = vsel %vm753, %v869, %v865
    %v871 = vlaneseq
    %v872 = vshrl.u32 %v871, 7
    %v873 = vsub.s32 %v755, %v872
    %v874 = vrot.slane %v623, %v873
    %v875 = vsel %vm760, %v874, %v870
    %v876 = vlaneseq
    %v877 = vshrl.u32 %v876, 7
    %v878 = vsub.s32 %v736, %v877
    %v879 = vrot.slane %v624, %v878
    %v880 = vlaneseq
    %v881 = vshrl.u32 %v880, 7
    %v882 = vsub.s32 %v741, %v881
    %v883 = vrot.slane %v625, %v882
    %v884 = vsel %vm746, %v883, %v879
    %v885 = vlaneseq
    %v886 = vshrl.u32 %v885, 7
    %v887 = vsub.s32 %v748, %v886
    %v888 = vrot.slane %v626, %v887
    %v889 = vsel %vm753, %v888, %v884
    %v890 = vlaneseq
    %v891 = vshrl.u32 %v890, 7
    %v892 = vsub.s32 %v755, %v891
    %v893 = vrot.slane %v627, %v892
    %v894 = vsel %vm760, %v893, %v889
    %v895 = vlaneseq
    %v896 = vshrl.u32 %v895, 7
    %v897 = vsub.s32 %v736, %v896
    %v898 = vrot.slane %v628, %v897
    %v899 = vlaneseq
    %v900 = vshrl.u32 %v899, 7
    %v901 = vsub.s32 %v741, %v900
    %v902 = vrot.slane %v629, %v901
    %v903 = vsel %vm746, %v902, %v898
    %v904 = vlaneseq
    %v905 = vshrl.u32 %v904, 7
    %v906 = vsub.s32 %v748, %v905
    %v907 = vrot.slane %v630, %v906
    %v908 = vsel %vm753, %v907, %v903
    %v909 = vlaneseq
    %v910 = vshrl.u32 %v909, 7
    %v911 = vsub.s32 %v755, %v910
    %v912 = vrot.slane %v631, %v911
    %v913 = vsel %vm760, %v912, %v908
    %v914 = vlaneseq
    %v915 = vshrl.u32 %v914, 7
    %v916 = vsub.s32 %v736, %v915
    %v917 = vrot.slane %v632, %v916
    %v918 = vlaneseq
    %v919 = vshrl.u32 %v918, 7
    %v920 = vsub.s32 %v741, %v919
    %v921 = vrot.slane %v633, %v920
    %v922 = vsel %vm746, %v921, %v917
    %v923 = vlaneseq
    %v924 = vshrl.u32 %v923, 7
    %v925 = vsub.s32 %v748, %v924
    %v926 = vrot.slane %v634, %v925
    %v927 = vsel %vm753, %v926, %v922
    %v928 = vlaneseq
    %v929 = vshrl.u32 %v928, 7
    %v930 = vsub.s32 %v755, %v929
    %v931 = vrot.slane %v635, %v930
    %v932 = vsel %vm760, %v931, %v927
    %v933 = vlaneseq
    %v934 = vshrl.u32 %v933, 7
    %v935 = vsub.s32 %v736, %v934
    %v936 = vrot.slane %v636, %v935
    %v937 = vlaneseq
    %v938 = vshrl.u32 %v937, 7
    %v939 = vsub.s32 %v741, %v938
    %v940 = vrot.slane %v637, %v939
    %v941 = vsel %vm746, %v940, %v936
    %v942 = vlaneseq
    %v943 = vshrl.u32 %v942, 7
    %v944 = vsub.s32 %v748, %v943
    %v945 = vrot.slane %v638, %v944
    %v946 = vsel %vm753, %v945, %v941
    %v947 = vlaneseq
    %v948 = vshrl.u32 %v947, 7
    %v949 = vsub.s32 %v755, %v948
    %v950 = vrot.slane %v639, %v949
    %v951 = vsel %vm760, %v950, %v946
    %v952 = vlaneseq
    %v953 = vshrl.u32 %v952, 7
    %v954 = vsub.s32 %v736, %v953
    %v955 = vrot.slane %v640, %v954
    %v956 = vlaneseq
    %v957 = vshrl.u32 %v956, 7
    %v958 = vsub.s32 %v741, %v957
    %v959 = vrot.slane %v641, %v958
    %v960 = vsel %vm746, %v959, %v955
    %v961 = vlaneseq
    %v962 = vshrl.u32 %v961, 7
    %v963 = vsub.s32 %v748, %v962
    %v964 = vrot.slane %v642, %v963
    %v965 = vsel %vm753, %v964, %v960
    %v966 = vlaneseq
    %v967 = vshrl.u32 %v966, 7
    %v968 = vsub.s32 %v755, %v967
    %v969 = vrot.slane %v643, %v968
    %v970 = vsel %vm760, %v969, %v965
    %v971 = vlaneseq
    %v972 = vshrl.u32 %v971, 7
    %v973 = vsub.s32 %v736, %v972
    %v974 = vrot.slane %v644, %v973
    %v975 = vlaneseq
    %v976 = vshrl.u32 %v975, 7
    %v977 = vsub.s32 %v741, %v976
    %v978 = vrot.slane %v645, %v977
    %v979 = vsel %vm746, %v978, %v974
    %v980 = vlaneseq
    %v981 = vshrl.u32 %v980, 7
    %v982 = vsub.s32 %v748, %v981
    %v983 = vrot.slane %v646, %v982
    %v984 = vsel %vm753, %v983, %v979
    %v985 = vlaneseq
    %v986 = vshrl.u32 %v985, 7
    %v987 = vsub.s32 %v755, %v986
    %v988 = vrot.slane %v647, %v987
    %v989 = vsel %vm760, %v988, %v984
    %v990 = vlaneseq
    %v991 = vshrl.u32 %v990, 7
    %v992 = vsub.s32 %v736, %v991
    %v993 = vrot.slane %v648, %v992
    %v994 = vlaneseq
    %v995 = vshrl.u32 %v994, 7
    %v996 = vsub.s32 %v741, %v995
    %v997 = vrot.slane %v649, %v996
    %v998 = vsel %vm746, %v997, %v993
    %v999 = vlaneseq
    %v1000 = vshrl.u32 %v999, 7
    %v1001 = vsub.s32 %v748, %v1000
    %v1002 = vrot.slane %v650, %v1001
    %v1003 = vsel %vm753, %v1002, %v998
    %v1004 = vlaneseq
    %v1005 = vshrl.u32 %v1004, 7
    %v1006 = vsub.s32 %v755, %v1005
    %v1007 = vrot.slane %v651, %v1006
    %v1008 = vsel %vm760, %v1007, %v1003
    %v1009 = vlaneseq
    %v1010 = vshrl.u32 %v1009, 7
    %v1011 = vsub.s32 %v736, %v1010
    %v1012 = vrot.slane %v652, %v1011
    %v1013 = vlaneseq
    %v1014 = vshrl.u32 %v1013, 7
    %v1015 = vsub.s32 %v741, %v1014
    %v1016 = vrot.slane %v653, %v1015
    %v1017 = vsel %vm746, %v1016, %v1012
    %v1018 = vlaneseq
    %v1019 = vshrl.u32 %v1018, 7
    %v1020 = vsub.s32 %v748, %v1019
    %v1021 = vrot.slane %v654, %v1020
    %v1022 = vsel %vm753, %v1021, %v1017
    %v1023 = vlaneseq
    %v1024 = vshrl.u32 %v1023, 7
    %v1025 = vsub.s32 %v755, %v1024
    %v1026 = vrot.slane %v655, %v1025
    %v1027 = vsel %vm760, %v1026, %v1022
    %v1028 = vlaneseq
    %v1029 = vshrl.u32 %v1028, 7
    %v1030 = vsub.s32 %v736, %v1029
    %v1031 = vrot.slane %v656, %v1030
    %v1032 = vlaneseq
    %v1033 = vshrl.u32 %v1032, 7
    %v1034 = vsub.s32 %v741, %v1033
    %v1035 = vrot.slane %v657, %v1034
    %v1036 = vsel %vm746, %v1035, %v1031
    %v1037 = vlaneseq
    %v1038 = vshrl.u32 %v1037, 7
    %v1039 = vsub.s32 %v748, %v1038
    %v1040 = vrot.slane %v658, %v1039
    %v1041 = vsel %vm753, %v1040, %v1036
    %v1042 = vlaneseq
    %v1043 = vshrl.u32 %v1042, 7
    %v1044 = vsub.s32 %v755, %v1043
    %v1045 = vrot.slane %v659, %v1044
    %v1046 = vsel %vm760, %v1045, %v1041
    %vm1047 = vcmask 1041409
    %v1048 = vsel %vm1047, %v780, %v761
    %vm1049 = vcmask 1042434
    %v1050 = vsel %vm1049, %v799, %v1048
    %vm1051 = vcmask 1043459
    %v1052 = vsel %vm1051, %v818, %v1050
    %vm1053 = vcmask 1044484
    %v1054 = vsel %vm1053, %v837, %v1052
    %vm1055 = vcmask 1045509
    %v1056 = vsel %vm1055, %v856, %v1054
    %vm1057 = vcmask 1046534
    %v1058 = vsel %vm1057, %v875, %v1056
    %vm1059 = vcmask 1047559
    %v1060 = vsel %vm1059, %v894, %v1058
    %v1061 = vsel %vm1047, %v932, %v913
    %v1062 = vsel %vm1049, %v951, %v1061
    %v1063 = vsel %vm1051, %v970, %v1062
    %v1064 = vsel %vm1053, %v989, %v1063
    %v1065 = vsel %vm1055, %v1008, %v1064
    %v1066 = vsel %vm1057, %v1027, %v1065
    %v1067 = vsel %vm1059, %v1046, %v1066
    %vm1068 = vcmask 261120
    %v1069 = vsel %vm1068, %v1060, 0
    %v1071 = vsel %vm1068, %v1067, 0
    %1073 = vmatprep.subr.mxu0 0.0
    %1074 = vmatpush1.msra.mxu0 0.0
    %1075 = vmatprep.subr.mxu0 0.0
    %1076 = vmatpush1.msra.mxu0 0.0
    %1077 = vmatprep.subr.mxu0 0.0
    %1078 = vmatpush1.msra.mxu0 0.0
    %1079 = vmatprep.subr.mxu0 0.0
    %1080 = vmatpush1.msra.mxu0 0.0
    %1081 = vmatprep.subr.mxu0 0.0
    %1082 = vmatpush1.msra.mxu0 0.0
    %1083 = vmatprep.subr.mxu0 0.0
    %1084 = vmatpush1.msra.mxu0 0.0
    %1085 = vmatprep.subr.mxu0 0.0
    %1086 = vmatpush1.msra.mxu0 0.0
    %1087 = vmatprep.subr.mxu0 0.0
    %1088 = vmatpush1.msra.mxu0 0.0
    %1089 = vmatprep.subr.mxu0 0.0
    %1090 = vmatpush1.msra.mxu0 0.0
    %1091 = vmatprep.subr.mxu0 0.0
    %1092 = vmatpush1.msra.mxu0 0.0
    %1093 = vmatprep.subr.mxu0 0.0
    %1094 = vmatpush1.msra.mxu0 0.0
    %1095 = vmatprep.subr.mxu0 0.0
    %1096 = vmatpush1.msra.mxu0 0.0
    %1097 = vmatprep.subr.mxu0 0.0
    %1098 = vmatpush1.msra.mxu0 %v663
    %1099 = vmatprep.subr.mxu0 0.0
    %1100 = vmatpush1.msra.mxu0 %v662
    %1101 = vmatprep.subr.mxu0 0.0
    %1102 = vmatpush1.msra.mxu0 %v661
    %1103 = vmatprep.subr.mxu0 0.0
    %1104 = vmatpush1.msra.mxu0 %v660
    %1105 = vmatprep.subr.mxu0 0.0
    %1106 = vmatpush2.msra.mxu0 0.0
    %1107 = vmatprep.subr.mxu0 0.0
    %1108 = vmatpush2.msra.mxu0 0.0
    %1109 = vmatprep.subr.mxu0 0.0
    %1110 = vmatpush2.msra.mxu0 0.0
    %1111 = vmatprep.subr.mxu0 0.0
    %1112 = vmatpush2.msra.mxu0 0.0
    %1113 = vmatprep.subr.mxu0 0.0
    %1114 = vmatpush2.msra.mxu0 0.0
    %1115 = vmatprep.subr.mxu0 0.0
    %1116 = vmatpush2.msra.mxu0 0.0
    %1117 = vmatprep.subr.mxu0 0.0
    %1118 = vmatpush2.msra.mxu0 0.0
    %1119 = vmatprep.subr.mxu0 0.0
    %1120 = vmatpush2.msra.mxu0 0.0
    %1121 = vmatprep.subr.mxu0 0.0
    %1122 = vmatpush2.msra.mxu0 0.0
    %1123 = vmatprep.subr.mxu0 0.0
    %1124 = vmatpush2.msra.mxu0 0.0
    %1125 = vmatprep.subr.mxu0 0.0
    %1126 = vmatpush2.msra.mxu0 0.0
    %1127 = vmatprep.subr.mxu0 0.0
    %1128 = vmatpush2.msra.mxu0 0.0
    %1129 = vmatprep.subr.mxu0 0.0
    %1130 = vmatpush2.msra.mxu0 0.0
    %1131 = vmatprep.subr.mxu0 0.0
    %1132 = vmatpush2.msra.mxu0 0.0
    %1133 = vmatprep.subr.mxu0 0.0
    %1134 = vmatpush2.msra.mxu0 0.0
    %1135 = vmatprep.subr.mxu0 0.0
    %1136 = vmatpush2.msra.mxu0 0.0
    %1137 = vmatprep.mubr.f32.mxu0 0.0
    %1138 = vmatmul.mubr.f32.gmra.mxu0 %v1069
    %v1139 = vpop.f32.mrf.mxu0
    %v1140 = vadd.f32 %v669, %v1139
    %v1141 = vpop.f32.mrf.mxu0
    %1142 = vmatprep.mubr.f32.mxu0 0.0
    %1143 = vmatmul.mubr.f32.gmra.mxu0 %v1071
    %v1144 = vpop.f32.mrf.mxu0
    %v1145 = vadd.f32 %v669, %v1144
    %v1146 = vpop.f32.mrf.mxu0
    %1147 = vdwg.mxu0
    %v1148 = vmax.f32 %v1140, 0.0
    %v1149 = vmax.f32 %v1145, 0.0
    %v1150 = vld [vmem:[#allocation7] sm:$0xff]
    %v1151 = vld [vmem:[#allocation7 + $0x8] sm:$0xff]
    %v1152 = vld [vmem:[#allocation7 + $0x10] sm:$0xff]
    %v1153 = vld [vmem:[#allocation7 + $0x18] sm:$0xff]
    %v1154 = vld [vmem:[#allocation7 + $0x20] sm:$0xff]
    %v1155 = vld [vmem:[#allocation7 + $0x28] sm:$0xff]
    %v1156 = vld [vmem:[#allocation7 + $0x30] sm:$0xff]
    %v1157 = vld [vmem:[#allocation7 + $0x38] sm:$0xff]
    %v1158 = vld [vmem:[%s4] sm:$0x1]
    %v1160 = vlaneseq
    %v1161 = vshrl.u32 %v1160, 7
    %v1162 = vsub.s32 0, %v1161
    %v1163 = vrot.slane %v1158, %v1162
    %v1166 = vsel %vm146, %v1148, 0
    %v1169 = vsel %vm146, %v1149, 0
    %1171 = vmatprep.subr.mxu0 0.0
    %1172 = vmatpush1.msra.mxu0 0.0
    %1173 = vmatprep.subr.mxu0 0.0
    %1174 = vmatpush1.msra.mxu0 0.0
    %1175 = vmatprep.subr.mxu0 0.0
    %1176 = vmatpush1.msra.mxu0 0.0
    %1177 = vmatprep.subr.mxu0 0.0
    %1178 = vmatpush1.msra.mxu0 0.0
    %1179 = vmatprep.subr.mxu0 0.0
    %1180 = vmatpush1.msra.mxu0 0.0
    %1181 = vmatprep.subr.mxu0 0.0
    %1182 = vmatpush1.msra.mxu0 0.0
    %1183 = vmatprep.subr.mxu0 0.0
    %1184 = vmatpush1.msra.mxu0 0.0
    %1185 = vmatprep.subr.mxu0 0.0
    %1186 = vmatpush1.msra.mxu0 0.0
    %1187 = vmatprep.subr.mxu0 0.0
    %1188 = vmatpush1.msra.mxu0 %v1157
    %1189 = vmatprep.subr.mxu0 0.0
    %1190 = vmatpush1.msra.mxu0 %v1156
    %1191 = vmatprep.subr.mxu0 0.0
    %1192 = vmatpush1.msra.mxu0 %v1155
    %1193 = vmatprep.subr.mxu0 0.0
    %1194 = vmatpush1.msra.mxu0 %v1154
    %1195 = vmatprep.subr.mxu0 0.0
    %1196 = vmatpush1.msra.mxu0 %v1153
    %1197 = vmatprep.subr.mxu0 0.0
    %1198 = vmatpush1.msra.mxu0 %v1152
    %1199 = vmatprep.subr.mxu0 0.0
    %1200 = vmatpush1.msra.mxu0 %v1151
    %1201 = vmatprep.subr.mxu0 0.0
    %1202 = vmatpush1.msra.mxu0 %v1150
    %1203 = vmatprep.subr.mxu0 0.0
    %1204 = vmatpush2.msra.mxu0 0.0
    %1205 = vmatprep.subr.mxu0 0.0
    %1206 = vmatpush2.msra.mxu0 0.0
    %1207 = vmatprep.subr.mxu0 0.0
    %1208 = vmatpush2.msra.mxu0 0.0
    %1209 = vmatprep.subr.mxu0 0.0
    %1210 = vmatpush2.msra.mxu0 0.0
    %1211 = vmatprep.subr.mxu0 0.0
    %1212 = vmatpush2.msra.mxu0 0.0
    %1213 = vmatprep.subr.mxu0 0.0
    %1214 = vmatpush2.msra.mxu0 0.0
    %1215 = vmatprep.subr.mxu0 0.0
    %1216 = vmatpush2.msra.mxu0 0.0
    %1217 = vmatprep.subr.mxu0 0.0
    %1218 = vmatpush2.msra.mxu0 0.0
    %1219 = vmatprep.subr.mxu0 0.0
    %1220 = vmatpush2.msra.mxu0 0.0
    %1221 = vmatprep.subr.mxu0 0.0
    %1222 = vmatpush2.msra.mxu0 0.0
    %1223 = vmatprep.subr.mxu0 0.0
    %1224 = vmatpush2.msra.mxu0 0.0
    %1225 = vmatprep.subr.mxu0 0.0
    %1226 = vmatpush2.msra.mxu0 0.0
    %1227 = vmatprep.subr.mxu0 0.0
    %1228 = vmatpush2.msra.mxu0 0.0
    %1229 = vmatprep.subr.mxu0 0.0
    %1230 = vmatpush2.msra.mxu0 0.0
    %1231 = vmatprep.subr.mxu0 0.0
    %1232 = vmatpush2.msra.mxu0 0.0
    %1233 = vmatprep.subr.mxu0 0.0
    %1234 = vmatpush2.msra.mxu0 0.0
    %1235 = vmatprep.mubr.f32.mxu0 0.0
    %1236 = vmatmul.mubr.f32.gmra.mxu0 %v1166
    %v1237 = vpop.f32.mrf.mxu0
    %v1238 = vadd.f32 %v1163, %v1237
    %v1239 = vpop.f32.mrf.mxu0
    %1240 = vmatprep.mubr.f32.mxu0 0.0
    %1241 = vmatmul.mubr.f32.gmra.mxu0 %v1169
    %v1242 = vpop.f32.mrf.mxu0
    %v1243 = vadd.f32 %v1163, %v1242
    %v1244 = vpop.f32.mrf.mxu0
    %1245 = vdwg.mxu0
    %v1246 = vmax.f32 %v1238, 0.0
    %v1247 = vmax.f32 %v1243, 0.0
    %v1248 = vld [vmem:[#allocation8] sm:$0xff]
    %v1249 = vld [vmem:[#allocation8 + $0x8] sm:$0xff]
    %v1250 = vld [vmem:[#allocation8 + $0x10] sm:$0xff]
    %v1251 = vld [vmem:[#allocation8 + $0x18] sm:$0xff]
    %v1252 = vld [vmem:[#allocation8 + $0x20] sm:$0xff]
    %v1253 = vld [vmem:[#allocation8 + $0x28] sm:$0xff]
    %v1254 = vld [vmem:[#allocation8 + $0x30] sm:$0xff]
    %v1255 = vld [vmem:[#allocation8 + $0x38] sm:$0xff]
    %v1256 = vld [vmem:[%s6] sm:$0x1]
    %v1258 = vlaneseq
    %v1259 = vshrl.u32 %v1258, 7
    %v1260 = vsub.s32 0, %v1259
    %v1261 = vrot.slane %v1256, %v1260
    %v1264 = vsel %vm146, %v1246, 0
    %v1267 = vsel %vm146, %v1247, 0
    %1269 = vmatprep.subr.mxu0 0.0
    %1270 = vmatpush1.msra.mxu0 0.0
    %1271 = vmatprep.subr.mxu0 0.0
    %1272 = vmatpush1.msra.mxu0 0.0
    %1273 = vmatprep.subr.mxu0 0.0
    %1274 = vmatpush1.msra.mxu0 0.0
    %1275 = vmatprep.subr.mxu0 0.0
    %1276 = vmatpush1.msra.mxu0 0.0
    %1277 = vmatprep.subr.mxu0 0.0
    %1278 = vmatpush1.msra.mxu0 0.0
    %1279 = vmatprep.subr.mxu0 0.0
    %1280 = vmatpush1.msra.mxu0 0.0
    %1281 = vmatprep.subr.mxu0 0.0
    %1282 = vmatpush1.msra.mxu0 0.0
    %1283 = vmatprep.subr.mxu0 0.0
    %1284 = vmatpush1.msra.mxu0 0.0
    %1285 = vmatprep.subr.mxu0 0.0
    %1286 = vmatpush1.msra.mxu0 %v1255
    %1287 = vmatprep.subr.mxu0 0.0
    %1288 = vmatpush1.msra.mxu0 %v1254
    %1289 = vmatprep.subr.mxu0 0.0
    %1290 = vmatpush1.msra.mxu0 %v1253
    %1291 = vmatprep.subr.mxu0 0.0
    %1292 = vmatpush1.msra.mxu0 %v1252
    %1293 = vmatprep.subr.mxu0 0.0
    %1294 = vmatpush1.msra.mxu0 %v1251
    %1295 = vmatprep.subr.mxu0 0.0
    %1296 = vmatpush1.msra.mxu0 %v1250
    %1297 = vmatprep.subr.mxu0 0.0
    %1298 = vmatpush1.msra.mxu0 %v1249
    %1299 = vmatprep.subr.mxu0 0.0
    %1300 = vmatpush1.msra.mxu0 %v1248
    %1301 = vmatprep.subr.mxu0 0.0
    %1302 = vmatpush2.msra.mxu0 0.0
    %1303 = vmatprep.subr.mxu0 0.0
    %1304 = vmatpush2.msra.mxu0 0.0
    %1305 = vmatprep.subr.mxu0 0.0
    %1306 = vmatpush2.msra.mxu0 0.0
    %1307 = vmatprep.subr.mxu0 0.0
    %1308 = vmatpush2.msra.mxu0 0.0
    %1309 = vmatprep.subr.mxu0 0.0
    %1310 = vmatpush2.msra.mxu0 0.0
    %1311 = vmatprep.subr.mxu0 0.0
    %1312 = vmatpush2.msra.mxu0 0.0
    %1313 = vmatprep.subr.mxu0 0.0
    %1314 = vmatpush2.msra.mxu0 0.0
    %1315 = vmatprep.subr.mxu0 0.0
    %1316 = vmatpush2.msra.mxu0 0.0
    %1317 = vmatprep.subr.mxu0 0.0
    %1318 = vmatpush2.msra.mxu0 0.0
    %1319 = vmatprep.subr.mxu0 0.0
    %1320 = vmatpush2.msra.mxu0 0.0
    %1321 = vmatprep.subr.mxu0 0.0
    %1322 = vmatpush2.msra.mxu0 0.0
    %1323 = vmatprep.subr.mxu0 0.0
    %1324 = vmatpush2.msra.mxu0 0.0
    %1325 = vmatprep.subr.mxu0 0.0
    %1326 = vmatpush2.msra.mxu0 0.0
    %1327 = vmatprep.subr.mxu0 0.0
    %1328 = vmatpush2.msra.mxu0 0.0
    %1329 = vmatprep.subr.mxu0 0.0
    %1330 = vmatpush2.msra.mxu0 0.0
    %1331 = vmatprep.subr.mxu0 0.0
    %1332 = vmatpush2.msra.mxu0 0.0
    %1333 = vmatprep.mubr.f32.mxu0 0.0
    %1334 = vmatmul.mubr.f32.gmra.mxu0 %v1264
    %v1335 = vpop.f32.mrf.mxu0
    %v1336 = vadd.f32 %v1261, %v1335
    %v1337 = vpop.f32.mrf.mxu0
    %1338 = vmatprep.mubr.f32.mxu0 0.0
    %1339 = vmatmul.mubr.f32.gmra.mxu0 %v1267
    %v1340 = vpop.f32.mrf.mxu0
    %v1341 = vadd.f32 %v1261, %v1340
    %v1342 = vpop.f32.mrf.mxu0
    %1343 = vdwg.mxu0
    %1344 = vst [vmem:[#allocation10] sm:$0xff] %v1336
    %1345 = vst [vmem:[#allocation10 + $0x8] sm:$0xff] %v1341
    // Predicated region
    $region46: #{tpu_custom_call.1} parent=1 // pred_check
      _
    $region47: #{tpu_custom_call.1} parent=1 // pred_check_branch
      %1347 = sbr.rel (0) target = $region49
    $region48: #{tpu_custom_call.1} parent=1 // pred_region
      %s1349 = ssub.s32 256, 256
      %1350 = vsyncadd [#allocation4], %s1349
      %s1351 = sshll.u32 [#allocation10], 4
      %s1352 = int_to_ptr.vmem [resolvable:$true] %s1351
      %1357 = dma.vmem_to_hbm [thread:$0]  %s1352, 256, %s7, [#allocation4], 128, 128, 8
    $region49: #{tpu_custom_call.1} parent=1 // pred_fallthru
      _
    // Predicated region
    $region50: #{tpu_custom_call.1} parent=1 // pred_check
      _
    $region51: #{tpu_custom_call.1} parent=1 // pred_check_branch
      %1359 = sbr.rel (0) target = $region53
    $region52: #{tpu_custom_call.1} parent=1 // pred_region
      %1360 = dma.done [#allocation4], 256
    $region53: #{tpu_custom_call.1} parent=1 // pred_fallthru
      _
    %1361 = vsyncpa [#allocation3], 1
    %1362 = vsyncpa [#allocation6], 1
    %1363 = vsyncpa [#allocation9], 1
    %1364 = vsyncpa [#allocation4], 1

</llo_original>
